<compile_context>
chip_gen: v5e
topology: v5e:2x2
jax: 0.10.0
libtpu: 0.0.40
codegen_flags: <defaults>
</compile_context>

<pallas_src>
import jax
import jax.numpy as jnp
from jax import lax
from jax.experimental import pallas as pl
from jax.experimental.pallas import tpu as pltpu


def _sigmoid(x):
    # tanh-form sigmoid: one EUP tanh, no divide on the critical path.
    return 0.5 * (jnp.tanh(0.5 * x) + 1.0)


def _make_kernel(BP, T, H):
    H2 = 2 * H
    bf16 = jnp.bfloat16

    def kernel(xin_ref,          # (T*BP, 2E) bf16, rows t*BP+b: [x_t | x_{T-1-t}]
               wih_ref,          # (2E, 8H)   bf16 fused, gate-grouped [i|f|o|g]
               bih_ref,          # (1, 8H)    f32 fused bias (b_ih + b_hh folded)
               whh_ref,          # (2H, 8H)   bf16 fused, gate-grouped recurrent
               w1f_ref,          # (2H, H)    bf16, bwd rows zeroed
               w1b_ref,          # (2H, H)    bf16, fwd rows zeroed
               b1_ref,           # (1, H)     f32
               w2_ref,           # (H, AP)    bf16, lane-padded to AP=128
               b2_ref,           # (1, AP)    f32
               out_ref):         # (T*BP, AP) f32, rows t*BP+b
        # ---- hoisted input projection: one matmul for all timesteps ----
        xp = (jnp.dot(xin_ref[...], wih_ref[...],
                      preferred_element_type=jnp.float32)
              + bih_ref[...])                                   # (T*BP, 8H) f32

        whh = whh_ref[...]                                      # (2H, 8H) bf16

        # ---- fused bidirectional recurrence, fully unrolled over T ----
        h = jnp.zeros((BP, H2), jnp.float32)                    # [h_fwd | h_bwd]
        c = jnp.zeros((BP, H2), jnp.float32)                    # [c_fwd | c_bwd]
        hs = []
        for t in range(T):
            gates = xp[t * BP:(t + 1) * BP, :] + jnp.dot(
                h.astype(bf16), whh,
                preferred_element_type=jnp.float32)             # (BP, 8H) f32
            # gate layout: [i | f | o | g], each 2H = [fwd | bwd] lanes.
            sig = _sigmoid(gates[:, 0:3 * H2])                  # one wide EUP push
            i_g = sig[:, 0 * H2:1 * H2]
            f_g = sig[:, 1 * H2:2 * H2]
            o_g = sig[:, 2 * H2:3 * H2]
            g_g = jnp.tanh(gates[:, 3 * H2:4 * H2])
            c = f_g * c + i_g * g_g
            h = o_g * jnp.tanh(c)
            hs.append(h)                                        # SSA, no VMEM stores

        # ---- assemble MLP operands (time-major), no lane slicing ----
        fwd_slab = jnp.concatenate(hs, axis=0)                  # (T*BP, 2H)
        bwd_slab = jnp.concatenate(hs[::-1], axis=0)            # (T*BP, 2H)

        # ---- hidden2APIs MLP (dropout = identity in eval mode) ----
        # flat @ w1 == fwd_half @ w1[:H] + bwd_half @ w1[H:], realized via
        # row-masked w1 copies so no lane extraction is needed.
        h1 = (jnp.dot(fwd_slab.astype(bf16), w1f_ref[...],
                      preferred_element_type=jnp.float32)
              + jnp.dot(bwd_slab.astype(bf16), w1b_ref[...],
                        preferred_element_type=jnp.float32)
              + b1_ref[...])                                    # (T*BP, H)
        h1 = jnp.where(h1 > 0, h1, 0.01 * h1)                   # LeakyReLU(0.01)
        out = (jnp.dot(h1.astype(bf16), w2_ref[...],
                       preferred_element_type=jnp.float32)
               + b2_ref[...])                                   # (T*BP, AP)
        out_ref[...] = out                                      # lane-dense store

    return kernel


_GATE_ORDER = [0, 1, 3, 2]  # [i, f, g, o] -> [i, f, o, g]


def _fuse_block_gatewise(wf, wb, H):
    """(K,4H)+(K,4H) -> (2K,8H) block matrix, gate-grouped columns
    [i_f,i_b | f_f,f_b | o_f,o_b | g_f,g_b]; rows 0:K act on the forward
    operand, rows K:2K on the backward operand (off-diagonal blocks zero)."""
    K = wf.shape[0]
    Wf = wf.reshape(K, 4, 1, H)[:, _GATE_ORDER]
    Wb = wb.reshape(K, 4, 1, H)[:, _GATE_ORDER]
    Z = jnp.zeros((K, 4, 1, H), wf.dtype)
    top = jnp.concatenate([Wf, Z], axis=2)          # (K, 4, 2, H)
    bot = jnp.concatenate([Z, Wb], axis=2)          # (K, 4, 2, H)
    return jnp.concatenate([top, bot], axis=0).reshape(2 * K, 8 * H)


def _fuse_bias_gatewise(bf, bb, H):
    Bf = bf.reshape(1, 4, 1, H)[:, _GATE_ORDER]
    Bb = bb.reshape(1, 4, 1, H)[:, _GATE_ORDER]
    return jnp.concatenate([Bf, Bb], axis=2).reshape(1, 8 * H)


def t2api_forward(title_ids, params):
    # Embedding lookup = gather (plain-JAX glue, not the hot path).
    emb = params["emb"][title_ids].astype(jnp.float32)          # (B, T, E)
    B, T, E = emb.shape
    H = params["whh_f"].shape[0]
    A = params["w2"].shape[1]
    BP = ((B + 7) // 8) * 8          # pad batch to the 8-row sublane granule
    AP = ((A + 127) // 128) * 128    # pad output to 128-lane granule

    # Fused input rows (time-major): [x_t | x_{T-1-t}], zero-padded to BP rows.
    x_tm = jnp.swapaxes(emb, 0, 1)                              # (T, B, E)
    xin = jnp.concatenate([x_tm, x_tm[::-1]], axis=-1)          # (T, B, 2E)
    xin = jnp.pad(xin, ((0, 0), (0, BP - B), (0, 0)))           # (T, BP, 2E)
    xin = xin.reshape(T * BP, 2 * E).astype(jnp.bfloat16)

    # Fused, gate-grouped weights (built once at trace time in the wrapper).
    wih_fused = _fuse_block_gatewise(params["wih_f"], params["wih_b"], H
                                     ).astype(jnp.bfloat16)     # (2E, 8H)
    whh_fused = _fuse_block_gatewise(params["whh_f"], params["whh_b"], H
                                     ).astype(jnp.bfloat16)     # (2H, 8H)
    b_fused = _fuse_bias_gatewise(params["b_f"], params["b_b"], H)  # (1, 8H) f32

    w1 = params["w1"]                                           # (2H, H)
    zH = jnp.zeros((H, H), w1.dtype)
    w1f = jnp.concatenate([w1[:H], zH], axis=0).astype(jnp.bfloat16)   # (2H, H)
    w1b = jnp.concatenate([zH, w1[H:]], axis=0).astype(jnp.bfloat16)   # (2H, H)

    w2p = jnp.pad(params["w2"], ((0, 0), (0, AP - A))).astype(jnp.bfloat16)  # (H, AP)
    b2p = jnp.pad(params["b2"], ((0, 0), (0, AP - A)))                       # (1, AP)

    vmem = pl.BlockSpec(memory_space=pltpu.MemorySpace.VMEM)
    args = (xin, wih_fused, b_fused, whh_fused,
            w1f, w1b, params["b1"], w2p, b2p)

    out_flat = pl.pallas_call(
        _make_kernel(BP, T, H),
        out_shape=jax.ShapeDtypeStruct((T * BP, AP), jnp.float32),
        in_specs=[vmem] * len(args),
        out_specs=vmem,
    )(*args)
    # TODO(synk): on v7x the fwd/bwd directions could be split across the two
    # TensorCores via core_map, but at B=2/T=8 the barrier + hidden exchange
    # costs more than the recurrence itself, so we stay single-core.
    out = jnp.swapaxes(out_flat.reshape(T, BP, AP), 0, 1)       # (BP, T, AP)
    return out[:B, :, :A]


def reference_forward(title_ids, params):
    """Pure-JAX f32 reference (mirrors PyTorch eval-mode forward)."""
    emb = params["emb"][title_ids].astype(jnp.float32)
    B, T, E = emb.shape
    H = params["whh_f"].shape[0]

    def make_cell(wih, whh, b):
        def cell(carry, xt):
            h, c = carry
            gates = xt @ wih + h @ whh + b
            i = jax.nn.sigmoid(gates[:, :H])
            f = jax.nn.sigmoid(gates[:, H:2 * H])
            g = jnp.tanh(gates[:, 2 * H:3 * H])
            o = jax.nn.sigmoid(gates[:, 3 * H:])
            c_new = f * c + i * g
            h_new = o * jnp.tanh(c_new)
            return (h_new, c_new), h_new
        return cell

    xs = jnp.swapaxes(emb, 0, 1)                                # (T, B, E)
    init = (jnp.zeros((B, H), jnp.float32), jnp.zeros((B, H), jnp.float32))
    _, hs_f = lax.scan(make_cell(params["wih_f"], params["whh_f"], params["b_f"]), init, xs)
    _, hs_b = lax.scan(make_cell(params["wih_b"], params["whh_b"], params["b_b"]), init, xs[::-1])
    hs_b = hs_b[::-1]
    lstm_out = jnp.swapaxes(jnp.concatenate([hs_f, hs_b], axis=-1), 0, 1)  # (B,T,2H)
    h1 = lstm_out @ params["w1"] + params["b1"]
    h1 = jnp.where(h1 > 0, h1, 0.01 * h1)
    return h1 @ params["w2"] + params["b2"]


def init_params(key, vocab, E, H, A):
    ks = jax.random.split(key, 16)
    s = 0.1
    f32 = jnp.float32
    return {
        "emb":   jax.random.normal(ks[0], (vocab, E), f32) * s,
        "wih_f": jax.random.normal(ks[1], (E, 4 * H), f32) * s,
        "whh_f": jax.random.normal(ks[2], (H, 4 * H), f32) * s,
        "b_f":   jax.random.normal(ks[3], (1, 4 * H), f32) * s,   # b_ih + b_hh folded
        "wih_b": jax.random.normal(ks[4], (E, 4 * H), f32) * s,
        "whh_b": jax.random.normal(ks[5], (H, 4 * H), f32) * s,
        "b_b":   jax.random.normal(ks[6], (1, 4 * H), f32) * s,
        "w1":    jax.random.normal(ks[7], (2 * H, H), f32) * s,
        "b1":    jax.random.normal(ks[8], (1, H), f32) * s,
        "w2":    jax.random.normal(ks[9], (H, A), f32) * s,
        "b2":    jax.random.normal(ks[10], (1, A), f32) * s,
    }


if __name__ == "__main__":
    # Module config: len(title_vocab)=50, emb_size=32, hidden_size=32,
    # n_layers=1, dropout=0.1 (eval -> identity), APIs_emb_size=16,
    # bidirectional=True.  Input: title_ids (batch=2, seq_len=8).
    VOCAB, E, H, A = 50, 32, 32, 16
    B, T = 2, 8

    key = jax.random.PRNGKey(0)
    k_ids, k_params = jax.random.split(key)
    params = init_params(k_params, VOCAB, E, H, A)
    title_ids = jax.random.randint(k_ids, (B, T), 0, VOCAB, dtype=jnp.int32)

    out = jax.block_until_ready(t2api_forward(title_ids, params))
    ref = jax.block_until_ready(reference_forward(title_ids, params))
    assert out.shape == (B, T, A)
    # Tolerance loosened vs. the f32 reference because matmul operands are
    # bf16 (f32 accumulation); observed error is ~1e-3, structural errors
    # would be >> 1e-2.
    assert jnp.allclose(out, ref, atol=1e-2, rtol=1e-2), "mismatch vs reference"

    print("KERNEL_OK")
</pallas_src>

<mosaic_0001>
module attributes {stable_mosaic.version = 11 : i64} {
  func.func @kernel(%arg0: memref<64x64xbf16, #tpu.memory_space<vmem>>, %arg1: memref<64x256xbf16, #tpu.memory_space<vmem>>, %arg2: memref<1x256xf32, #tpu.memory_space<vmem>>, %arg3: memref<64x256xbf16, #tpu.memory_space<vmem>>, %arg4: memref<64x32xbf16, #tpu.memory_space<vmem>>, %arg5: memref<64x32xbf16, #tpu.memory_space<vmem>>, %arg6: memref<1x32xf32, #tpu.memory_space<vmem>>, %arg7: memref<32x128xbf16, #tpu.memory_space<vmem>>, %arg8: memref<1x128xf32, #tpu.memory_space<vmem>>, %arg9: memref<64x128xf32, #tpu.memory_space<vmem>>) attributes {dimension_semantics = [], scalar_prefetch = 0 : i64, scratch_operands = 0 : i64, tpu.core_type = #tpu.core_type<tc>} {
    %c0 = arith.constant 0 : index
    %c0_0 = arith.constant 0 : index
    %0 = vector.load %arg0[%c0, %c0_0] : memref<64x64xbf16, #tpu.memory_space<vmem>>, vector<64x64xbf16>
    %c0_1 = arith.constant 0 : index
    %c0_2 = arith.constant 0 : index
    %1 = vector.load %arg1[%c0_1, %c0_2] : memref<64x256xbf16, #tpu.memory_space<vmem>>, vector<64x256xbf16>
    %cst = arith.constant dense<0.000000e+00> : vector<64x256xf32>
    %2 = tpu.matmul %0, %1, %cst {dimension_numbers = #tpu.dot_dimension_numbers<[1], [0], [0], [1], [0, 0, 1, 1], [], []>} : vector<64x64xbf16>, vector<64x256xbf16>, vector<64x256xf32> -> vector<64x256xf32>
    %c0_3 = arith.constant 0 : index
    %c0_4 = arith.constant 0 : index
    %3 = vector.load %arg2[%c0_3, %c0_4] : memref<1x256xf32, #tpu.memory_space<vmem>>, vector<1x256xf32>
    %4 = vector.broadcast %3 : vector<1x256xf32> to vector<64x256xf32>
    %5 = arith.addf %2, %4 : vector<64x256xf32>
    %c0_5 = arith.constant 0 : index
    %c0_6 = arith.constant 0 : index
    %6 = vector.load %arg3[%c0_5, %c0_6] : memref<64x256xbf16, #tpu.memory_space<vmem>>, vector<64x256xbf16>
    %cst_7 = arith.constant 0.000000e+00 : f32
    %7 = vector.broadcast %cst_7 : f32 to vector<8x64xf32>
    %cst_8 = arith.constant 0.000000e+00 : f32
    %8 = vector.broadcast %cst_8 : f32 to vector<8x64xf32>
    %9 = vector.extract_strided_slice %5 {offsets = [0, 0], sizes = [8, 256], strides = [1, 1]} : vector<64x256xf32> to vector<8x256xf32>
    %10 = arith.truncf %7 : vector<8x64xf32> to vector<8x64xbf16>
    %cst_9 = arith.constant dense<0.000000e+00> : vector<8x256xf32>
    %11 = tpu.matmul %10, %6, %cst_9 {dimension_numbers = #tpu.dot_dimension_numbers<[1], [0], [0], [1], [0, 0, 1, 1], [], []>} : vector<8x64xbf16>, vector<64x256xbf16>, vector<8x256xf32> -> vector<8x256xf32>
    %12 = arith.addf %9, %11 : vector<8x256xf32>
    %13 = vector.extract_strided_slice %12 {offsets = [0, 0], sizes = [8, 192], strides = [1, 1]} : vector<8x256xf32> to vector<8x192xf32>
    %cst_10 = arith.constant 5.000000e-01 : f32
    %14 = vector.broadcast %cst_10 : f32 to vector<8x192xf32>
    %15 = arith.mulf %14, %13 : vector<8x192xf32>
    %16 = math.tanh %15 : vector<8x192xf32>
    %cst_11 = arith.constant 1.000000e+00 : f32
    %17 = vector.broadcast %cst_11 : f32 to vector<8x192xf32>
    %18 = arith.addf %16, %17 : vector<8x192xf32>
    %cst_12 = arith.constant 5.000000e-01 : f32
    %19 = vector.broadcast %cst_12 : f32 to vector<8x192xf32>
    %20 = arith.mulf %19, %18 : vector<8x192xf32>
    %21 = vector.extract_strided_slice %20 {offsets = [0, 0], sizes = [8, 64], strides = [1, 1]} : vector<8x192xf32> to vector<8x64xf32>
    %22 = vector.extract_strided_slice %20 {offsets = [0, 64], sizes = [8, 64], strides = [1, 1]} : vector<8x192xf32> to vector<8x64xf32>
    %23 = vector.extract_strided_slice %20 {offsets = [0, 128], sizes = [8, 64], strides = [1, 1]} : vector<8x192xf32> to vector<8x64xf32>
    %24 = vector.extract_strided_slice %12 {offsets = [0, 192], sizes = [8, 64], strides = [1, 1]} : vector<8x256xf32> to vector<8x64xf32>
    %25 = math.tanh %24 : vector<8x64xf32>
    %26 = arith.mulf %22, %8 : vector<8x64xf32>
    %27 = arith.mulf %21, %25 : vector<8x64xf32>
    %28 = arith.addf %26, %27 : vector<8x64xf32>
    %29 = math.tanh %28 : vector<8x64xf32>
    %30 = arith.mulf %23, %29 : vector<8x64xf32>
    %31 = vector.extract_strided_slice %5 {offsets = [8, 0], sizes = [8, 256], strides = [1, 1]} : vector<64x256xf32> to vector<8x256xf32>
    %32 = arith.truncf %30 : vector<8x64xf32> to vector<8x64xbf16>
    %cst_13 = arith.constant dense<0.000000e+00> : vector<8x256xf32>
    %33 = tpu.matmul %32, %6, %cst_13 {dimension_numbers = #tpu.dot_dimension_numbers<[1], [0], [0], [1], [0, 0, 1, 1], [], []>} : vector<8x64xbf16>, vector<64x256xbf16>, vector<8x256xf32> -> vector<8x256xf32>
    %34 = arith.addf %31, %33 : vector<8x256xf32>
    %35 = vector.extract_strided_slice %34 {offsets = [0, 0], sizes = [8, 192], strides = [1, 1]} : vector<8x256xf32> to vector<8x192xf32>
    %cst_14 = arith.constant 5.000000e-01 : f32
    %36 = vector.broadcast %cst_14 : f32 to vector<8x192xf32>
    %37 = arith.mulf %36, %35 : vector<8x192xf32>
    %38 = math.tanh %37 : vector<8x192xf32>
    %cst_15 = arith.constant 1.000000e+00 : f32
    %39 = vector.broadcast %cst_15 : f32 to vector<8x192xf32>
    %40 = arith.addf %38, %39 : vector<8x192xf32>
    %cst_16 = arith.constant 5.000000e-01 : f32
    %41 = vector.broadcast %cst_16 : f32 to vector<8x192xf32>
    %42 = arith.mulf %41, %40 : vector<8x192xf32>
    %43 = vector.extract_strided_slice %42 {offsets = [0, 0], sizes = [8, 64], strides = [1, 1]} : vector<8x192xf32> to vector<8x64xf32>
    %44 = vector.extract_strided_slice %42 {offsets = [0, 64], sizes = [8, 64], strides = [1, 1]} : vector<8x192xf32> to vector<8x64xf32>
    %45 = vector.extract_strided_slice %42 {offsets = [0, 128], sizes = [8, 64], strides = [1, 1]} : vector<8x192xf32> to vector<8x64xf32>
    %46 = vector.extract_strided_slice %34 {offsets = [0, 192], sizes = [8, 64], strides = [1, 1]} : vector<8x256xf32> to vector<8x64xf32>
    %47 = math.tanh %46 : vector<8x64xf32>
    %48 = arith.mulf %44, %28 : vector<8x64xf32>
    %49 = arith.mulf %43, %47 : vector<8x64xf32>
    %50 = arith.addf %48, %49 : vector<8x64xf32>
    %51 = math.tanh %50 : vector<8x64xf32>
    %52 = arith.mulf %45, %51 : vector<8x64xf32>
    %53 = vector.extract_strided_slice %5 {offsets = [16, 0], sizes = [8, 256], strides = [1, 1]} : vector<64x256xf32> to vector<8x256xf32>
    %54 = arith.truncf %52 : vector<8x64xf32> to vector<8x64xbf16>
    %cst_17 = arith.constant dense<0.000000e+00> : vector<8x256xf32>
    %55 = tpu.matmul %54, %6, %cst_17 {dimension_numbers = #tpu.dot_dimension_numbers<[1], [0], [0], [1], [0, 0, 1, 1], [], []>} : vector<8x64xbf16>, vector<64x256xbf16>, vector<8x256xf32> -> vector<8x256xf32>
    %56 = arith.addf %53, %55 : vector<8x256xf32>
    %57 = vector.extract_strided_slice %56 {offsets = [0, 0], sizes = [8, 192], strides = [1, 1]} : vector<8x256xf32> to vector<8x192xf32>
    %cst_18 = arith.constant 5.000000e-01 : f32
    %58 = vector.broadcast %cst_18 : f32 to vector<8x192xf32>
    %59 = arith.mulf %58, %57 : vector<8x192xf32>
    %60 = math.tanh %59 : vector<8x192xf32>
    %cst_19 = arith.constant 1.000000e+00 : f32
    %61 = vector.broadcast %cst_19 : f32 to vector<8x192xf32>
    %62 = arith.addf %60, %61 : vector<8x192xf32>
    %cst_20 = arith.constant 5.000000e-01 : f32
    %63 = vector.broadcast %cst_20 : f32 to vector<8x192xf32>
    %64 = arith.mulf %63, %62 : vector<8x192xf32>
    %65 = vector.extract_strided_slice %64 {offsets = [0, 0], sizes = [8, 64], strides = [1, 1]} : vector<8x192xf32> to vector<8x64xf32>
    %66 = vector.extract_strided_slice %64 {offsets = [0, 64], sizes = [8, 64], strides = [1, 1]} : vector<8x192xf32> to vector<8x64xf32>
    %67 = vector.extract_strided_slice %64 {offsets = [0, 128], sizes = [8, 64], strides = [1, 1]} : vector<8x192xf32> to vector<8x64xf32>
    %68 = vector.extract_strided_slice %56 {offsets = [0, 192], sizes = [8, 64], strides = [1, 1]} : vector<8x256xf32> to vector<8x64xf32>
    %69 = math.tanh %68 : vector<8x64xf32>
    %70 = arith.mulf %66, %50 : vector<8x64xf32>
    %71 = arith.mulf %65, %69 : vector<8x64xf32>
    %72 = arith.addf %70, %71 : vector<8x64xf32>
    %73 = math.tanh %72 : vector<8x64xf32>
    %74 = arith.mulf %67, %73 : vector<8x64xf32>
    %75 = vector.extract_strided_slice %5 {offsets = [24, 0], sizes = [8, 256], strides = [1, 1]} : vector<64x256xf32> to vector<8x256xf32>
    %76 = arith.truncf %74 : vector<8x64xf32> to vector<8x64xbf16>
    %cst_21 = arith.constant dense<0.000000e+00> : vector<8x256xf32>
    %77 = tpu.matmul %76, %6, %cst_21 {dimension_numbers = #tpu.dot_dimension_numbers<[1], [0], [0], [1], [0, 0, 1, 1], [], []>} : vector<8x64xbf16>, vector<64x256xbf16>, vector<8x256xf32> -> vector<8x256xf32>
    %78 = arith.addf %75, %77 : vector<8x256xf32>
    %79 = vector.extract_strided_slice %78 {offsets = [0, 0], sizes = [8, 192], strides = [1, 1]} : vector<8x256xf32> to vector<8x192xf32>
    %cst_22 = arith.constant 5.000000e-01 : f32
    %80 = vector.broadcast %cst_22 : f32 to vector<8x192xf32>
    %81 = arith.mulf %80, %79 : vector<8x192xf32>
    %82 = math.tanh %81 : vector<8x192xf32>
    %cst_23 = arith.constant 1.000000e+00 : f32
    %83 = vector.broadcast %cst_23 : f32 to vector<8x192xf32>
    %84 = arith.addf %82, %83 : vector<8x192xf32>
    %cst_24 = arith.constant 5.000000e-01 : f32
    %85 = vector.broadcast %cst_24 : f32 to vector<8x192xf32>
    %86 = arith.mulf %85, %84 : vector<8x192xf32>
    %87 = vector.extract_strided_slice %86 {offsets = [0, 0], sizes = [8, 64], strides = [1, 1]} : vector<8x192xf32> to vector<8x64xf32>
    %88 = vector.extract_strided_slice %86 {offsets = [0, 64], sizes = [8, 64], strides = [1, 1]} : vector<8x192xf32> to vector<8x64xf32>
    %89 = vector.extract_strided_slice %86 {offsets = [0, 128], sizes = [8, 64], strides = [1, 1]} : vector<8x192xf32> to vector<8x64xf32>
    %90 = vector.extract_strided_slice %78 {offsets = [0, 192], sizes = [8, 64], strides = [1, 1]} : vector<8x256xf32> to vector<8x64xf32>
    %91 = math.tanh %90 : vector<8x64xf32>
    %92 = arith.mulf %88, %72 : vector<8x64xf32>
    %93 = arith.mulf %87, %91 : vector<8x64xf32>
    %94 = arith.addf %92, %93 : vector<8x64xf32>
    %95 = math.tanh %94 : vector<8x64xf32>
    %96 = arith.mulf %89, %95 : vector<8x64xf32>
    %97 = vector.extract_strided_slice %5 {offsets = [32, 0], sizes = [8, 256], strides = [1, 1]} : vector<64x256xf32> to vector<8x256xf32>
    %98 = arith.truncf %96 : vector<8x64xf32> to vector<8x64xbf16>
    %cst_25 = arith.constant dense<0.000000e+00> : vector<8x256xf32>
    %99 = tpu.matmul %98, %6, %cst_25 {dimension_numbers = #tpu.dot_dimension_numbers<[1], [0], [0], [1], [0, 0, 1, 1], [], []>} : vector<8x64xbf16>, vector<64x256xbf16>, vector<8x256xf32> -> vector<8x256xf32>
    %100 = arith.addf %97, %99 : vector<8x256xf32>
    %101 = vector.extract_strided_slice %100 {offsets = [0, 0], sizes = [8, 192], strides = [1, 1]} : vector<8x256xf32> to vector<8x192xf32>
    %cst_26 = arith.constant 5.000000e-01 : f32
    %102 = vector.broadcast %cst_26 : f32 to vector<8x192xf32>
    %103 = arith.mulf %102, %101 : vector<8x192xf32>
    %104 = math.tanh %103 : vector<8x192xf32>
    %cst_27 = arith.constant 1.000000e+00 : f32
    %105 = vector.broadcast %cst_27 : f32 to vector<8x192xf32>
    %106 = arith.addf %104, %105 : vector<8x192xf32>
    %cst_28 = arith.constant 5.000000e-01 : f32
    %107 = vector.broadcast %cst_28 : f32 to vector<8x192xf32>
    %108 = arith.mulf %107, %106 : vector<8x192xf32>
    %109 = vector.extract_strided_slice %108 {offsets = [0, 0], sizes = [8, 64], strides = [1, 1]} : vector<8x192xf32> to vector<8x64xf32>
    %110 = vector.extract_strided_slice %108 {offsets = [0, 64], sizes = [8, 64], strides = [1, 1]} : vector<8x192xf32> to vector<8x64xf32>
    %111 = vector.extract_strided_slice %108 {offsets = [0, 128], sizes = [8, 64], strides = [1, 1]} : vector<8x192xf32> to vector<8x64xf32>
    %112 = vector.extract_strided_slice %100 {offsets = [0, 192], sizes = [8, 64], strides = [1, 1]} : vector<8x256xf32> to vector<8x64xf32>
    %113 = math.tanh %112 : vector<8x64xf32>
    %114 = arith.mulf %110, %94 : vector<8x64xf32>
    %115 = arith.mulf %109, %113 : vector<8x64xf32>
    %116 = arith.addf %114, %115 : vector<8x64xf32>
    %117 = math.tanh %116 : vector<8x64xf32>
    %118 = arith.mulf %111, %117 : vector<8x64xf32>
    %119 = vector.extract_strided_slice %5 {offsets = [40, 0], sizes = [8, 256], strides = [1, 1]} : vector<64x256xf32> to vector<8x256xf32>
    %120 = arith.truncf %118 : vector<8x64xf32> to vector<8x64xbf16>
    %cst_29 = arith.constant dense<0.000000e+00> : vector<8x256xf32>
    %121 = tpu.matmul %120, %6, %cst_29 {dimension_numbers = #tpu.dot_dimension_numbers<[1], [0], [0], [1], [0, 0, 1, 1], [], []>} : vector<8x64xbf16>, vector<64x256xbf16>, vector<8x256xf32> -> vector<8x256xf32>
    %122 = arith.addf %119, %121 : vector<8x256xf32>
    %123 = vector.extract_strided_slice %122 {offsets = [0, 0], sizes = [8, 192], strides = [1, 1]} : vector<8x256xf32> to vector<8x192xf32>
    %cst_30 = arith.constant 5.000000e-01 : f32
    %124 = vector.broadcast %cst_30 : f32 to vector<8x192xf32>
    %125 = arith.mulf %124, %123 : vector<8x192xf32>
    %126 = math.tanh %125 : vector<8x192xf32>
    %cst_31 = arith.constant 1.000000e+00 : f32
    %127 = vector.broadcast %cst_31 : f32 to vector<8x192xf32>
    %128 = arith.addf %126, %127 : vector<8x192xf32>
    %cst_32 = arith.constant 5.000000e-01 : f32
    %129 = vector.broadcast %cst_32 : f32 to vector<8x192xf32>
    %130 = arith.mulf %129, %128 : vector<8x192xf32>
    %131 = vector.extract_strided_slice %130 {offsets = [0, 0], sizes = [8, 64], strides = [1, 1]} : vector<8x192xf32> to vector<8x64xf32>
    %132 = vector.extract_strided_slice %130 {offsets = [0, 64], sizes = [8, 64], strides = [1, 1]} : vector<8x192xf32> to vector<8x64xf32>
    %133 = vector.extract_strided_slice %130 {offsets = [0, 128], sizes = [8, 64], strides = [1, 1]} : vector<8x192xf32> to vector<8x64xf32>
    %134 = vector.extract_strided_slice %122 {offsets = [0, 192], sizes = [8, 64], strides = [1, 1]} : vector<8x256xf32> to vector<8x64xf32>
    %135 = math.tanh %134 : vector<8x64xf32>
    %136 = arith.mulf %132, %116 : vector<8x64xf32>
    %137 = arith.mulf %131, %135 : vector<8x64xf32>
    %138 = arith.addf %136, %137 : vector<8x64xf32>
    %139 = math.tanh %138 : vector<8x64xf32>
    %140 = arith.mulf %133, %139 : vector<8x64xf32>
    %141 = vector.extract_strided_slice %5 {offsets = [48, 0], sizes = [8, 256], strides = [1, 1]} : vector<64x256xf32> to vector<8x256xf32>
    %142 = arith.truncf %140 : vector<8x64xf32> to vector<8x64xbf16>
    %cst_33 = arith.constant dense<0.000000e+00> : vector<8x256xf32>
    %143 = tpu.matmul %142, %6, %cst_33 {dimension_numbers = #tpu.dot_dimension_numbers<[1], [0], [0], [1], [0, 0, 1, 1], [], []>} : vector<8x64xbf16>, vector<64x256xbf16>, vector<8x256xf32> -> vector<8x256xf32>
    %144 = arith.addf %141, %143 : vector<8x256xf32>
    %145 = vector.extract_strided_slice %144 {offsets = [0, 0], sizes = [8, 192], strides = [1, 1]} : vector<8x256xf32> to vector<8x192xf32>
    %cst_34 = arith.constant 5.000000e-01 : f32
    %146 = vector.broadcast %cst_34 : f32 to vector<8x192xf32>
    %147 = arith.mulf %146, %145 : vector<8x192xf32>
    %148 = math.tanh %147 : vector<8x192xf32>
    %cst_35 = arith.constant 1.000000e+00 : f32
    %149 = vector.broadcast %cst_35 : f32 to vector<8x192xf32>
    %150 = arith.addf %148, %149 : vector<8x192xf32>
    %cst_36 = arith.constant 5.000000e-01 : f32
    %151 = vector.broadcast %cst_36 : f32 to vector<8x192xf32>
    %152 = arith.mulf %151, %150 : vector<8x192xf32>
    %153 = vector.extract_strided_slice %152 {offsets = [0, 0], sizes = [8, 64], strides = [1, 1]} : vector<8x192xf32> to vector<8x64xf32>
    %154 = vector.extract_strided_slice %152 {offsets = [0, 64], sizes = [8, 64], strides = [1, 1]} : vector<8x192xf32> to vector<8x64xf32>
    %155 = vector.extract_strided_slice %152 {offsets = [0, 128], sizes = [8, 64], strides = [1, 1]} : vector<8x192xf32> to vector<8x64xf32>
    %156 = vector.extract_strided_slice %144 {offsets = [0, 192], sizes = [8, 64], strides = [1, 1]} : vector<8x256xf32> to vector<8x64xf32>
    %157 = math.tanh %156 : vector<8x64xf32>
    %158 = arith.mulf %154, %138 : vector<8x64xf32>
    %159 = arith.mulf %153, %157 : vector<8x64xf32>
    %160 = arith.addf %158, %159 : vector<8x64xf32>
    %161 = math.tanh %160 : vector<8x64xf32>
    %162 = arith.mulf %155, %161 : vector<8x64xf32>
    %163 = vector.extract_strided_slice %5 {offsets = [56, 0], sizes = [8, 256], strides = [1, 1]} : vector<64x256xf32> to vector<8x256xf32>
    %164 = arith.truncf %162 : vector<8x64xf32> to vector<8x64xbf16>
    %cst_37 = arith.constant dense<0.000000e+00> : vector<8x256xf32>
    %165 = tpu.matmul %164, %6, %cst_37 {dimension_numbers = #tpu.dot_dimension_numbers<[1], [0], [0], [1], [0, 0, 1, 1], [], []>} : vector<8x64xbf16>, vector<64x256xbf16>, vector<8x256xf32> -> vector<8x256xf32>
    %166 = arith.addf %163, %165 : vector<8x256xf32>
    %167 = vector.extract_strided_slice %166 {offsets = [0, 0], sizes = [8, 192], strides = [1, 1]} : vector<8x256xf32> to vector<8x192xf32>
    %cst_38 = arith.constant 5.000000e-01 : f32
    %168 = vector.broadcast %cst_38 : f32 to vector<8x192xf32>
    %169 = arith.mulf %168, %167 : vector<8x192xf32>
    %170 = math.tanh %169 : vector<8x192xf32>
    %cst_39 = arith.constant 1.000000e+00 : f32
    %171 = vector.broadcast %cst_39 : f32 to vector<8x192xf32>
    %172 = arith.addf %170, %171 : vector<8x192xf32>
    %cst_40 = arith.constant 5.000000e-01 : f32
    %173 = vector.broadcast %cst_40 : f32 to vector<8x192xf32>
    %174 = arith.mulf %173, %172 : vector<8x192xf32>
    %175 = vector.extract_strided_slice %174 {offsets = [0, 0], sizes = [8, 64], strides = [1, 1]} : vector<8x192xf32> to vector<8x64xf32>
    %176 = vector.extract_strided_slice %174 {offsets = [0, 64], sizes = [8, 64], strides = [1, 1]} : vector<8x192xf32> to vector<8x64xf32>
    %177 = vector.extract_strided_slice %174 {offsets = [0, 128], sizes = [8, 64], strides = [1, 1]} : vector<8x192xf32> to vector<8x64xf32>
    %178 = vector.extract_strided_slice %166 {offsets = [0, 192], sizes = [8, 64], strides = [1, 1]} : vector<8x256xf32> to vector<8x64xf32>
    %179 = math.tanh %178 : vector<8x64xf32>
    %180 = arith.mulf %176, %160 : vector<8x64xf32>
    %181 = arith.mulf %175, %179 : vector<8x64xf32>
    %182 = arith.addf %180, %181 : vector<8x64xf32>
    %183 = math.tanh %182 : vector<8x64xf32>
    %184 = arith.mulf %177, %183 : vector<8x64xf32>
    %185 = tpu.concatenate %30, %52, %74, %96, %118, %140, %162, %184 in 0 : vector<8x64xf32>, vector<8x64xf32>, vector<8x64xf32>, vector<8x64xf32>, vector<8x64xf32>, vector<8x64xf32>, vector<8x64xf32>, vector<8x64xf32> -> vector<64x64xf32>
    %186 = tpu.concatenate %184, %162, %140, %118, %96, %74, %52, %30 in 0 : vector<8x64xf32>, vector<8x64xf32>, vector<8x64xf32>, vector<8x64xf32>, vector<8x64xf32>, vector<8x64xf32>, vector<8x64xf32>, vector<8x64xf32> -> vector<64x64xf32>
    %187 = arith.truncf %185 : vector<64x64xf32> to vector<64x64xbf16>
    %c0_41 = arith.constant 0 : index
    %c0_42 = arith.constant 0 : index
    %188 = vector.load %arg4[%c0_41, %c0_42] : memref<64x32xbf16, #tpu.memory_space<vmem>>, vector<64x32xbf16>
    %cst_43 = arith.constant dense<0.000000e+00> : vector<64x32xf32>
    %189 = tpu.matmul %187, %188, %cst_43 {dimension_numbers = #tpu.dot_dimension_numbers<[1], [0], [0], [1], [0, 0, 1, 1], [], []>} : vector<64x64xbf16>, vector<64x32xbf16>, vector<64x32xf32> -> vector<64x32xf32>
    %190 = arith.truncf %186 : vector<64x64xf32> to vector<64x64xbf16>
    %c0_44 = arith.constant 0 : index
    %c0_45 = arith.constant 0 : index
    %191 = vector.load %arg5[%c0_44, %c0_45] : memref<64x32xbf16, #tpu.memory_space<vmem>>, vector<64x32xbf16>
    %cst_46 = arith.constant dense<0.000000e+00> : vector<64x32xf32>
    %192 = tpu.matmul %190, %191, %cst_46 {dimension_numbers = #tpu.dot_dimension_numbers<[1], [0], [0], [1], [0, 0, 1, 1], [], []>} : vector<64x64xbf16>, vector<64x32xbf16>, vector<64x32xf32> -> vector<64x32xf32>
    %193 = arith.addf %189, %192 : vector<64x32xf32>
    %c0_47 = arith.constant 0 : index
    %c0_48 = arith.constant 0 : index
    %194 = vector.load %arg6[%c0_47, %c0_48] : memref<1x32xf32, #tpu.memory_space<vmem>>, vector<1x32xf32>
    %195 = vector.broadcast %194 : vector<1x32xf32> to vector<64x32xf32>
    %196 = arith.addf %193, %195 : vector<64x32xf32>
    %cst_49 = arith.constant 0.000000e+00 : f32
    %197 = vector.broadcast %cst_49 : f32 to vector<64x32xf32>
    %198 = arith.cmpf ogt, %196, %197 : vector<64x32xf32>
    %cst_50 = arith.constant 0.00999999977 : f32
    %199 = vector.broadcast %cst_50 : f32 to vector<64x32xf32>
    %200 = arith.mulf %199, %196 : vector<64x32xf32>
    %201 = arith.select %198, %196, %200 : vector<64x32xi1>, vector<64x32xf32>
    %202 = arith.truncf %201 : vector<64x32xf32> to vector<64x32xbf16>
    %c0_51 = arith.constant 0 : index
    %c0_52 = arith.constant 0 : index
    %203 = vector.load %arg7[%c0_51, %c0_52] : memref<32x128xbf16, #tpu.memory_space<vmem>>, vector<32x128xbf16>
    %cst_53 = arith.constant dense<0.000000e+00> : vector<64x128xf32>
    %204 = tpu.matmul %202, %203, %cst_53 {dimension_numbers = #tpu.dot_dimension_numbers<[1], [0], [0], [1], [0, 0, 1, 1], [], []>} : vector<64x32xbf16>, vector<32x128xbf16>, vector<64x128xf32> -> vector<64x128xf32>
    %c0_54 = arith.constant 0 : index
    %c0_55 = arith.constant 0 : index
    %205 = vector.load %arg8[%c0_54, %c0_55] : memref<1x128xf32, #tpu.memory_space<vmem>>, vector<1x128xf32>
    %206 = vector.broadcast %205 : vector<1x128xf32> to vector<64x128xf32>
    %207 = arith.addf %204, %206 : vector<64x128xf32>
    %c0_56 = arith.constant 0 : index
    %c0_57 = arith.constant 0 : index
    %208 = vector.load %arg9[%c0_56, %c0_57] : memref<64x128xf32, #tpu.memory_space<vmem>>, vector<64x128xf32>
    tpu.vector_store %arg9[%c0_56, %c0_57], %207 {strides = array<i32>} : memref<64x128xf32, #tpu.memory_space<vmem>>, vector<64x128xf32>,
    return
  }
}

</mosaic_0001>

<llo_original>
// kernel: tpu_custom_call.1
$region0: #{tpu_custom_call.1}
  #allocation0 [shape = 'u32[]', space=smem, size = 0x4, offset = 0x4, fixed_abs, tag = 'smem constant byte address 0x4 - core index']
  #allocation1 [shape = 'u32[72,128]{1,0:T(1,128)}', space=vmem, size = 0x9000, scoped, tag = 'internal scratch']
  %s0 = inlined_call_operand.hbm [shape: bf16[64,64], index: 0, kind: input, shape index: {}]
  %s1 = inlined_call_operand.vmem [shape: bf16[64,256], index: 1, kind: input, shape index: {}]
  %s2 = inlined_call_operand.hbm [shape: f32[1,256], index: 2, kind: input, shape index: {}]
  %s3 = inlined_call_operand.hbm [shape: bf16[64,256], index: 3, kind: input, shape index: {}]
  %s4 = inlined_call_operand.vmem [shape: bf16[64,32], index: 4, kind: input, shape index: {}]
  %s5 = inlined_call_operand.vmem [shape: bf16[64,32], index: 5, kind: input, shape index: {}]
  %s6 = inlined_call_operand.vmem [shape: f32[1,32], index: 6, kind: input, shape index: {}]
  %s7 = inlined_call_operand.vmem [shape: bf16[32,128], index: 7, kind: input, shape index: {}]
  %s8 = inlined_call_operand.vmem [shape: f32[1,128], index: 8, kind: input, shape index: {}]
  %s9 = inlined_call_operand.hbm [shape: f32[64,128], index: 9, kind: output, shape index: {}]
  %s10 = sld [smem:[#allocation0]]
  $region58: #{tpu_custom_call.1} parent=0
    _
  %s12 = ssub.s32 1, %s10
  %s13 = scalar_select 0, %s12, %s10
  $region1: #{tpu_custom_call.1} parent=0
    #allocation2 [shape = 'u8[16384]{0}', space=vmem, size = 0x4000, scoped, tag = 'input window, operand 0, single buffered']
    #allocation3 [shape = 's32[1]{0}', space=sflag, size = 0x4, scoped, tag = 'scoped memory for tpu_custom_call.1']
    #allocation4 [shape = 's32[1]{0}', space=sflag, size = 0x4, scoped, tag = 'scoped memory for tpu_custom_call.1']
    #allocation5 [shape = 'u8[1024]{0}', space=vmem, size = 0x400, scoped, tag = 'input window, operand 2, single buffered']
    #allocation6 [shape = 's32[1]{0}', space=sflag, size = 0x4, scoped, tag = 'scoped memory for tpu_custom_call.1']
    #allocation7 [shape = 'u8[32768]{0}', space=vmem, size = 0x8000, scoped, tag = 'input window, operand 3, single buffered']
    #allocation8 [shape = 'u8[32768]{0}', space=vmem, size = 0x8000, scoped, tag = 'output window, operand 0, single buffered']
    %14 = vsyncpa [#allocation3], 0
    %15 = vsyncpa [#allocation6], 0
    %16 = vsyncpa [#allocation4], 0
    // Predicated region
    $region2: #{tpu_custom_call.1} parent=1 // pred_check
      _
    $region3: #{tpu_custom_call.1} parent=1 // pred_check_branch
      %18 = sbr.rel (0) target = $region5
    $region4: #{tpu_custom_call.1} parent=1 // pred_region
      %20 = vsyncadd [#allocation3], 0
      %s21 = sshll.u32 %s0, 4
      %s22 = int_to_ptr.hbm [resolvable:$true] %s21
      %s23 = sshll.u32 [#allocation2], 4
      %s24 = int_to_ptr.vmem [resolvable:$true] %s23
      %29 = dma.hbm_to_vmem [thread:$0]  %s22, 512, %s24, [#allocation3], 64, 64, 4
    $region5: #{tpu_custom_call.1} parent=1 // pred_fallthru
      _
    // Predicated region
    $region6: #{tpu_custom_call.1} parent=1 // pred_check
      _
    $region7: #{tpu_custom_call.1} parent=1 // pred_check_branch
      %31 = sbr.rel (0) target = $region9
    $region8: #{tpu_custom_call.1} parent=1 // pred_region
      _
    $region9: #{tpu_custom_call.1} parent=1 // pred_fallthru
      _
    // Predicated region
    $region10: #{tpu_custom_call.1} parent=1 // pred_check
      _
    $region11: #{tpu_custom_call.1} parent=1 // pred_check_branch
      %33 = sbr.rel (0) target = $region13
    $region12: #{tpu_custom_call.1} parent=1 // pred_region
      %35 = vsyncadd [#allocation6], 0
      %s37 = sshll.u32 %s2, 4
      %s38 = int_to_ptr.hbm [resolvable:$true] %s37
      %s39 = sshll.u32 [#allocation5], 4
      %s40 = int_to_ptr.vmem [resolvable:$true] %s39
      %42 = dma.hbm_to_vmem [thread:$0]  %s38, 32, %s40, [#allocation6]
    $region13: #{tpu_custom_call.1} parent=1 // pred_fallthru
      _
    // Predicated region
    $region14: #{tpu_custom_call.1} parent=1 // pred_check
      _
    $region15: #{tpu_custom_call.1} parent=1 // pred_check_branch
      %44 = sbr.rel (0) target = $region17
    $region16: #{tpu_custom_call.1} parent=1 // pred_region
      %46 = vsyncadd [#allocation6], 0
      %s47 = sshll.u32 %s3, 4
      %s48 = int_to_ptr.hbm [resolvable:$true] %s47
      %s49 = sshll.u32 [#allocation7], 4
      %s50 = int_to_ptr.vmem [resolvable:$true] %s49
      %55 = dma.hbm_to_vmem [thread:$0]  %s48, 1024, %s50, [#allocation6], 128, 128, 8
    $region17: #{tpu_custom_call.1} parent=1 // pred_fallthru
      _
    // Predicated region
    $region18: #{tpu_custom_call.1} parent=1 // pred_check
      _
    $region19: #{tpu_custom_call.1} parent=1 // pred_check_branch
      %57 = sbr.rel (0) target = $region21
    $region20: #{tpu_custom_call.1} parent=1 // pred_region
      _
    $region21: #{tpu_custom_call.1} parent=1 // pred_fallthru
      _
    // Predicated region
    $region22: #{tpu_custom_call.1} parent=1 // pred_check
      _
    $region23: #{tpu_custom_call.1} parent=1 // pred_check_branch
      %59 = sbr.rel (0) target = $region25
    $region24: #{tpu_custom_call.1} parent=1 // pred_region
      _
    $region25: #{tpu_custom_call.1} parent=1 // pred_fallthru
      _
    // Predicated region
    $region26: #{tpu_custom_call.1} parent=1 // pred_check
      _
    $region27: #{tpu_custom_call.1} parent=1 // pred_check_branch
      %61 = sbr.rel (0) target = $region29
    $region28: #{tpu_custom_call.1} parent=1 // pred_region
      _
    $region29: #{tpu_custom_call.1} parent=1 // pred_fallthru
      _
    // Predicated region
    $region30: #{tpu_custom_call.1} parent=1 // pred_check
      _
    $region31: #{tpu_custom_call.1} parent=1 // pred_check_branch
      %63 = sbr.rel (0) target = $region33
    $region32: #{tpu_custom_call.1} parent=1 // pred_region
      _
    $region33: #{tpu_custom_call.1} parent=1 // pred_fallthru
      _
    // Predicated region
    $region34: #{tpu_custom_call.1} parent=1 // pred_check
      _
    $region35: #{tpu_custom_call.1} parent=1 // pred_check_branch
      %65 = sbr.rel (0) target = $region37
    $region36: #{tpu_custom_call.1} parent=1 // pred_region
      _
    $region37: #{tpu_custom_call.1} parent=1 // pred_fallthru
      _
    // Predicated region
    $region38: #{tpu_custom_call.1} parent=1 // pred_check
      _
    $region39: #{tpu_custom_call.1} parent=1 // pred_check_branch
      %67 = sbr.rel (0) target = $region41
    $region40: #{tpu_custom_call.1} parent=1 // pred_region
      %69 = dma.done [#allocation3], 512
    $region41: #{tpu_custom_call.1} parent=1 // pred_fallthru
      _
    // Predicated region
    $region42: #{tpu_custom_call.1} parent=1 // pred_check
      _
    $region43: #{tpu_custom_call.1} parent=1 // pred_check_branch
      %71 = sbr.rel (0) target = $region45
    $region44: #{tpu_custom_call.1} parent=1 // pred_region
      %73 = dma.done [#allocation6], 32
    $region45: #{tpu_custom_call.1} parent=1 // pred_fallthru
      _
    // Predicated region
    $region46: #{tpu_custom_call.1} parent=1 // pred_check
      _
    $region47: #{tpu_custom_call.1} parent=1 // pred_check_branch
      %75 = sbr.rel (0) target = $region49
    $region48: #{tpu_custom_call.1} parent=1 // pred_region
      %77 = dma.done [#allocation6], 1024
    $region49: #{tpu_custom_call.1} parent=1 // pred_fallthru
      _
    %v79 = vld [vmem:[#allocation2] sm:$0xf]
    %v80 = vld [vmem:[#allocation2 + $0x4] sm:$0xf]
    %v81 = vld [vmem:[#allocation2 + $0x8] sm:$0xf]
    %v82 = vld [vmem:[#allocation2 + $0xc] sm:$0xf]
    %v83 = vld [vmem:[#allocation2 + $0x10] sm:$0xf]
    %v84 = vld [vmem:[#allocation2 + $0x14] sm:$0xf]
    %v85 = vld [vmem:[#allocation2 + $0x18] sm:$0xf]
    %v86 = vld [vmem:[#allocation2 + $0x1c] sm:$0xf]
    %v87 = vld [vmem:[%s1] sm:$0xff]
    %v88 = vld [vmem:[%s1 + $0x8] sm:$0xff]
    %v89 = vld [vmem:[%s1 + $0x10] sm:$0xff]
    %v90 = vld [vmem:[%s1 + $0x18] sm:$0xff]
    %v91 = vld [vmem:[%s1 + $0x20] sm:$0xff]
    %v92 = vld [vmem:[%s1 + $0x28] sm:$0xff]
    %v93 = vld [vmem:[%s1 + $0x30] sm:$0xff]
    %v94 = vld [vmem:[%s1 + $0x38] sm:$0xff]
    %v95 = vld [vmem:[#allocation5] sm:$0x3]
    %v97 = vperm.slane %v95, 0
    %v98 = vperm.slane %v95, 1
    %v109 = vunpack.c.l.b16 %v79
    %v110 = vunpack.c.l.b16 %v80
    %v111 = vunpack.c.l.b16 %v81
    %v112 = vunpack.c.l.b16 %v82
    %v113 = vunpack.c.l.b16 %v83
    %v114 = vunpack.c.l.b16 %v84
    %v115 = vunpack.c.l.b16 %v85
    %v116 = vunpack.c.l.b16 %v86
    %v117 = vpack.c.b16 %v110, %v109
    %v118 = vpack.c.b16 %v112, %v111
    %v119 = vpack.c.b16 %v114, %v113
    %v120 = vpack.c.b16 %v116, %v115
    %v129 = vunpack.c.l.b16 %v87
    %v130 = vunpack.c.h.b16 %v87
    %v131 = vunpack.c.l.b16 %v88
    %v132 = vunpack.c.h.b16 %v88
    %v133 = vunpack.c.l.b16 %v89
    %v134 = vunpack.c.h.b16 %v89
    %v135 = vunpack.c.l.b16 %v90
    %v136 = vunpack.c.h.b16 %v90
    %v137 = vunpack.c.l.b16 %v91
    %v138 = vunpack.c.h.b16 %v91
    %v139 = vunpack.c.l.b16 %v92
    %v140 = vunpack.c.h.b16 %v92
    %v141 = vunpack.c.l.b16 %v93
    %v142 = vunpack.c.h.b16 %v93
    %v143 = vunpack.c.l.b16 %v94
    %v144 = vunpack.c.h.b16 %v94
    %v145 = vpack.c.b16 %v131, %v129
    %v146 = vpack.c.b16 %v132, %v130
    %v147 = vpack.c.b16 %v135, %v133
    %v148 = vpack.c.b16 %v136, %v134
    %v149 = vpack.c.b16 %v139, %v137
    %v150 = vpack.c.b16 %v140, %v138
    %v151 = vpack.c.b16 %v143, %v141
    %v152 = vpack.c.b16 %v144, %v142
    %vm161 = vcmask 523264
    %v163 = vsel %vm161, %v117, 0
    %v166 = vsel %vm161, %v118, 0
    %v169 = vsel %vm161, %v119, 0
    %v172 = vsel %vm161, %v120, 0
    %174 = vmatpush.bf16.msra.mxu0 0
    %175 = vmatpush.bf16.msra.mxu0 0
    %176 = vmatpush.bf16.msra.mxu0 0
    %177 = vmatpush.bf16.msra.mxu0 0
    %178 = vmatpush.bf16.msra.mxu0 %v151
    %179 = vmatpush.bf16.msra.mxu0 %v149
    %180 = vmatpush.bf16.msra.mxu0 %v147
    %181 = vmatpush.bf16.msra.mxu0 %v145
    %182 = vmatmul.bf16.gmra.mxu0 %v163
    %v183 = vpop.f32.mrf.mxu0
    %v184 = vadd.f32 %v97, %v183
    %v185 = vpop.f32.mrf.mxu0
    %v186 = vadd.f32 %v97, %v185
    %187 = vmatmul.bf16.gmra.mxu0 %v166
    %v188 = vpop.f32.mrf.mxu0
    %v189 = vadd.f32 %v97, %v188
    %v190 = vpop.f32.mrf.mxu0
    %v191 = vadd.f32 %v97, %v190
    %192 = vmatmul.bf16.gmra.mxu0 %v169
    %v193 = vpop.f32.mrf.mxu0
    %v194 = vadd.f32 %v97, %v193
    %v195 = vpop.f32.mrf.mxu0
    %v196 = vadd.f32 %v97, %v195
    %197 = vmatmul.bf16.gmra.mxu0 %v172
    %v198 = vpop.f32.mrf.mxu0
    %v199 = vadd.f32 %v97, %v198
    %v200 = vpop.f32.mrf.mxu0
    %v201 = vadd.f32 %v97, %v200
    %202 = vdwg.mxu0
    %203 = vmatpush.bf16.msra.mxu0 0
    %204 = vmatpush.bf16.msra.mxu0 0
    %205 = vmatpush.bf16.msra.mxu0 0
    %206 = vmatpush.bf16.msra.mxu0 0
    %207 = vmatpush.bf16.msra.mxu0 %v152
    %208 = vmatpush.bf16.msra.mxu0 %v150
    %209 = vmatpush.bf16.msra.mxu0 %v148
    %210 = vmatpush.bf16.msra.mxu0 %v146
    %211 = vmatmul.bf16.gmra.mxu0 %v163
    %v212 = vpop.f32.mrf.mxu0
    %v213 = vadd.f32 %v98, %v212
    %v214 = vpop.f32.mrf.mxu0
    %v215 = vadd.f32 %v98, %v214
    %216 = vmatmul.bf16.gmra.mxu0 %v166
    %v217 = vpop.f32.mrf.mxu0
    %v218 = vadd.f32 %v98, %v217
    %v219 = vpop.f32.mrf.mxu0
    %v220 = vadd.f32 %v98, %v219
    %221 = vmatmul.bf16.gmra.mxu0 %v169
    %v222 = vpop.f32.mrf.mxu0
    %v223 = vadd.f32 %v98, %v222
    %v224 = vpop.f32.mrf.mxu0
    %v225 = vadd.f32 %v98, %v224
    %226 = vmatmul.bf16.gmra.mxu0 %v172
    %v227 = vpop.f32.mrf.mxu0
    %v228 = vadd.f32 %v98, %v227
    %v229 = vpop.f32.mrf.mxu0
    %v230 = vadd.f32 %v98, %v229
    %231 = vdwg.mxu0
    %v232 = vld [vmem:[#allocation7] sm:$0xff]
    %v233 = vld [vmem:[#allocation7 + $0x8] sm:$0xff]
    %v234 = vld [vmem:[#allocation7 + $0x10] sm:$0xff]
    %v235 = vld [vmem:[#allocation7 + $0x18] sm:$0xff]
    %v236 = vld [vmem:[#allocation7 + $0x20] sm:$0xff]
    %v237 = vld [vmem:[#allocation7 + $0x28] sm:$0xff]
    %v238 = vld [vmem:[#allocation7 + $0x30] sm:$0xff]
    %v239 = vld [vmem:[#allocation7 + $0x38] sm:$0xff]
    %v248 = vunpack.c.l.b16 %v232
    %v249 = vunpack.c.h.b16 %v232
    %v250 = vunpack.c.l.b16 %v233
    %v251 = vunpack.c.h.b16 %v233
    %v252 = vunpack.c.l.b16 %v234
    %v253 = vunpack.c.h.b16 %v234
    %v254 = vunpack.c.l.b16 %v235
    %v255 = vunpack.c.h.b16 %v235
    %v256 = vunpack.c.l.b16 %v236
    %v257 = vunpack.c.h.b16 %v236
    %v258 = vunpack.c.l.b16 %v237
    %v259 = vunpack.c.h.b16 %v237
    %v260 = vunpack.c.l.b16 %v238
    %v261 = vunpack.c.h.b16 %v238
    %v262 = vunpack.c.l.b16 %v239
    %v263 = vunpack.c.h.b16 %v239
    %v264 = vpack.c.b16 %v250, %v248
    %v265 = vpack.c.b16 %v251, %v249
    %v266 = vpack.c.b16 %v254, %v252
    %v267 = vpack.c.b16 %v255, %v253
    %v268 = vpack.c.b16 %v258, %v256
    %v269 = vpack.c.b16 %v259, %v257
    %v270 = vpack.c.b16 %v262, %v260
    %v271 = vpack.c.b16 %v263, %v261
    %v281 = vsel %vm161, 0, 0
    %283 = vmatpush.bf16.msra.mxu0 0
    %284 = vmatpush.bf16.msra.mxu0 0
    %285 = vmatpush.bf16.msra.mxu0 0
    %286 = vmatpush.bf16.msra.mxu0 0
    %287 = vmatpush.bf16.msra.mxu0 %v270
    %288 = vmatpush.bf16.msra.mxu0 %v268
    %289 = vmatpush.bf16.msra.mxu0 %v266
    %290 = vmatpush.bf16.msra.mxu0 %v264
    %291 = vmatmul.bf16.gmra.mxu0 %v281
    %v292 = vpop.f32.mrf.mxu0
    %v293 = vadd.f32 0.0, %v292
    %v294 = vpop.f32.mrf.mxu0
    %295 = vdwg.mxu0
    %296 = vmatpush.bf16.msra.mxu0 0
    %297 = vmatpush.bf16.msra.mxu0 0
    %298 = vmatpush.bf16.msra.mxu0 0
    %299 = vmatpush.bf16.msra.mxu0 0
    %300 = vmatpush.bf16.msra.mxu0 %v271
    %301 = vmatpush.bf16.msra.mxu0 %v269
    %302 = vmatpush.bf16.msra.mxu0 %v267
    %303 = vmatpush.bf16.msra.mxu0 %v265
    %304 = vmatmul.bf16.gmra.mxu0 %v281
    %v305 = vpop.f32.mrf.mxu0
    %v306 = vadd.f32 0.0, %v305
    %v307 = vpop.f32.mrf.mxu0
    %308 = vdwg.mxu0
    %v309 = vadd.f32 %v184, %v293
    %v310 = vadd.f32 %v213, %v306
    %v311 = vmul.f32 %v309, 0.5
    %v312 = vmul.f32 %v310, 0.5
    %v313 = vtanh.pop %v311
    %v314 = vtanh.pop %v312
    %v315 = vadd.f32 %v313, 1.0
    %v316 = vadd.f32 %v314, 1.0
    %v317 = vmul.f32 %v315, 0.5
    %v318 = vmul.f32 %v316, 0.5
    %v319 = vtanh.pop %v310
    %v320 = vmul.f32 %v317, 0.0
    %322 = vrot.lane.b32.xlu0 %v319, 64
    %v323 = vpop.permute.xlu0 %322
    %v325 = vmul.f32 %v317, %v323
    %327 = vrot.lane.b32.xlu0 %v325, 64
    %v328 = vpop.permute.xlu0 %327
    %v330 = vadd.f32 %v320, %v328
    %v331 = vtanh.pop %v330
    %333 = vrot.lane.b32.xlu0 %v331, 64
    %v334 = vpop.permute.xlu0 %333
    %v336 = vmul.f32 %v318, %v334
    %v337 = vpack.c.bf16 %v336, %v336
    %v339 = vsel %vm161, %v337, 0
    %341 = vmatpush.bf16.msra.mxu0 0
    %342 = vmatpush.bf16.msra.mxu0 0
    %343 = vmatpush.bf16.msra.mxu0 0
    %344 = vmatpush.bf16.msra.mxu0 0
    %345 = vmatpush.bf16.msra.mxu0 %v270
    %346 = vmatpush.bf16.msra.mxu0 %v268
    %347 = vmatpush.bf16.msra.mxu0 %v266
    %348 = vmatpush.bf16.msra.mxu0 %v264
    %349 = vmatmul.bf16.gmra.mxu0 %v339
    %v350 = vpop.f32.mrf.mxu0
    %v351 = vadd.f32 0.0, %v350
    %v352 = vpop.f32.mrf.mxu0
    %353 = vdwg.mxu0
    %354 = vmatpush.bf16.msra.mxu0 0
    %355 = vmatpush.bf16.msra.mxu0 0
    %356 = vmatpush.bf16.msra.mxu0 0
    %357 = vmatpush.bf16.msra.mxu0 0
    %358 = vmatpush.bf16.msra.mxu0 %v271
    %359 = vmatpush.bf16.msra.mxu0 %v269
    %360 = vmatpush.bf16.msra.mxu0 %v267
    %361 = vmatpush.bf16.msra.mxu0 %v265
    %362 = vmatmul.bf16.gmra.mxu0 %v339
    %v363 = vpop.f32.mrf.mxu0
    %v364 = vadd.f32 0.0, %v363
    %v365 = vpop.f32.mrf.mxu0
    %366 = vdwg.mxu0
    %v367 = vadd.f32 %v186, %v351
    %v368 = vadd.f32 %v215, %v364
    %v369 = vmul.f32 %v367, 0.5
    %v370 = vmul.f32 %v368, 0.5
    %v371 = vtanh.pop %v369
    %v372 = vtanh.pop %v370
    %v373 = vadd.f32 %v371, 1.0
    %v374 = vadd.f32 %v372, 1.0
    %v375 = vmul.f32 %v373, 0.5
    %v376 = vmul.f32 %v374, 0.5
    %v377 = vtanh.pop %v368
    %v378 = vmul.f32 %v375, %v330
    %380 = vrot.lane.b32.xlu0 %v377, 64
    %v381 = vpop.permute.xlu0 %380
    %v383 = vmul.f32 %v375, %v381
    %385 = vrot.lane.b32.xlu0 %v383, 64
    %v386 = vpop.permute.xlu0 %385
    %v388 = vadd.f32 %v378, %v386
    %v389 = vtanh.pop %v388
    %391 = vrot.lane.b32.xlu0 %v389, 64
    %v392 = vpop.permute.xlu0 %391
    %v394 = vmul.f32 %v376, %v392
    %v395 = vpack.c.bf16 %v394, %v394
    %v397 = vsel %vm161, %v395, 0
    %399 = vmatpush.bf16.msra.mxu0 0
    %400 = vmatpush.bf16.msra.mxu0 0
    %401 = vmatpush.bf16.msra.mxu0 0
    %402 = vmatpush.bf16.msra.mxu0 0
    %403 = vmatpush.bf16.msra.mxu0 %v270
    %404 = vmatpush.bf16.msra.mxu0 %v268
    %405 = vmatpush.bf16.msra.mxu0 %v266
    %406 = vmatpush.bf16.msra.mxu0 %v264
    %407 = vmatmul.bf16.gmra.mxu0 %v397
    %v408 = vpop.f32.mrf.mxu0
    %v409 = vadd.f32 0.0, %v408
    %v410 = vpop.f32.mrf.mxu0
    %411 = vdwg.mxu0
    %412 = vmatpush.bf16.msra.mxu0 0
    %413 = vmatpush.bf16.msra.mxu0 0
    %414 = vmatpush.bf16.msra.mxu0 0
    %415 = vmatpush.bf16.msra.mxu0 0
    %416 = vmatpush.bf16.msra.mxu0 %v271
    %417 = vmatpush.bf16.msra.mxu0 %v269
    %418 = vmatpush.bf16.msra.mxu0 %v267
    %419 = vmatpush.bf16.msra.mxu0 %v265
    %420 = vmatmul.bf16.gmra.mxu0 %v397
    %v421 = vpop.f32.mrf.mxu0
    %v422 = vadd.f32 0.0, %v421
    %v423 = vpop.f32.mrf.mxu0
    %424 = vdwg.mxu0
    %v425 = vadd.f32 %v189, %v409
    %v426 = vadd.f32 %v218, %v422
    %v427 = vmul.f32 %v425, 0.5
    %v428 = vmul.f32 %v426, 0.5
    %v429 = vtanh.pop %v427
    %v430 = vtanh.pop %v428
    %v431 = vadd.f32 %v429, 1.0
    %v432 = vadd.f32 %v430, 1.0
    %v433 = vmul.f32 %v431, 0.5
    %v434 = vmul.f32 %v432, 0.5
    %v435 = vtanh.pop %v426
    %v436 = vmul.f32 %v433, %v388
    %438 = vrot.lane.b32.xlu0 %v435, 64
    %v439 = vpop.permute.xlu0 %438
    %v441 = vmul.f32 %v433, %v439
    %443 = vrot.lane.b32.xlu0 %v441, 64
    %v444 = vpop.permute.xlu0 %443
    %v446 = vadd.f32 %v436, %v444
    %v447 = vtanh.pop %v446
    %449 = vrot.lane.b32.xlu0 %v447, 64
    %v450 = vpop.permute.xlu0 %449
    %v452 = vmul.f32 %v434, %v450
    %v453 = vpack.c.bf16 %v452, %v452
    %v455 = vsel %vm161, %v453, 0
    %457 = vmatpush.bf16.msra.mxu0 0
    %458 = vmatpush.bf16.msra.mxu0 0
    %459 = vmatpush.bf16.msra.mxu0 0
    %460 = vmatpush.bf16.msra.mxu0 0
    %461 = vmatpush.bf16.msra.mxu0 %v270
    %462 = vmatpush.bf16.msra.mxu0 %v268
    %463 = vmatpush.bf16.msra.mxu0 %v266
    %464 = vmatpush.bf16.msra.mxu0 %v264
    %465 = vmatmul.bf16.gmra.mxu0 %v455
    %v466 = vpop.f32.mrf.mxu0
    %v467 = vadd.f32 0.0, %v466
    %v468 = vpop.f32.mrf.mxu0
    %469 = vdwg.mxu0
    %470 = vmatpush.bf16.msra.mxu0 0
    %471 = vmatpush.bf16.msra.mxu0 0
    %472 = vmatpush.bf16.msra.mxu0 0
    %473 = vmatpush.bf16.msra.mxu0 0
    %474 = vmatpush.bf16.msra.mxu0 %v271
    %475 = vmatpush.bf16.msra.mxu0 %v269
    %476 = vmatpush.bf16.msra.mxu0 %v267
    %477 = vmatpush.bf16.msra.mxu0 %v265
    %478 = vmatmul.bf16.gmra.mxu0 %v455
    %v479 = vpop.f32.mrf.mxu0
    %v480 = vadd.f32 0.0, %v479
    %v481 = vpop.f32.mrf.mxu0
    %482 = vdwg.mxu0
    %v483 = vadd.f32 %v191, %v467
    %v484 = vadd.f32 %v220, %v480
    %v485 = vmul.f32 %v483, 0.5
    %v486 = vmul.f32 %v484, 0.5
    %v487 = vtanh.pop %v485
    %v488 = vtanh.pop %v486
    %v489 = vadd.f32 %v487, 1.0
    %v490 = vadd.f32 %v488, 1.0
    %v491 = vmul.f32 %v489, 0.5
    %v492 = vmul.f32 %v490, 0.5
    %v493 = vtanh.pop %v484
    %v494 = vmul.f32 %v491, %v446
    %496 = vrot.lane.b32.xlu0 %v493, 64
    %v497 = vpop.permute.xlu0 %496
    %v499 = vmul.f32 %v491, %v497
    %501 = vrot.lane.b32.xlu0 %v499, 64
    %v502 = vpop.permute.xlu0 %501
    %v504 = vadd.f32 %v494, %v502
    %v505 = vtanh.pop %v504
    %507 = vrot.lane.b32.xlu0 %v505, 64
    %v508 = vpop.permute.xlu0 %507
    %v510 = vmul.f32 %v492, %v508
    %v511 = vpack.c.bf16 %v510, %v510
    %v513 = vsel %vm161, %v511, 0
    %515 = vmatpush.bf16.msra.mxu0 0
    %516 = vmatpush.bf16.msra.mxu0 0
    %517 = vmatpush.bf16.msra.mxu0 0
    %518 = vmatpush.bf16.msra.mxu0 0
    %519 = vmatpush.bf16.msra.mxu0 %v270
    %520 = vmatpush.bf16.msra.mxu0 %v268
    %521 = vmatpush.bf16.msra.mxu0 %v266
    %522 = vmatpush.bf16.msra.mxu0 %v264
    %523 = vmatmul.bf16.gmra.mxu0 %v513
    %v524 = vpop.f32.mrf.mxu0
    %v525 = vadd.f32 0.0, %v524
    %v526 = vpop.f32.mrf.mxu0
    %527 = vdwg.mxu0
    %528 = vmatpush.bf16.msra.mxu0 0
    %529 = vmatpush.bf16.msra.mxu0 0
    %530 = vmatpush.bf16.msra.mxu0 0
    %531 = vmatpush.bf16.msra.mxu0 0
    %532 = vmatpush.bf16.msra.mxu0 %v271
    %533 = vmatpush.bf16.msra.mxu0 %v269
    %534 = vmatpush.bf16.msra.mxu0 %v267
    %535 = vmatpush.bf16.msra.mxu0 %v265
    %536 = vmatmul.bf16.gmra.mxu0 %v513
    %v537 = vpop.f32.mrf.mxu0
    %v538 = vadd.f32 0.0, %v537
    %v539 = vpop.f32.mrf.mxu0
    %540 = vdwg.mxu0
    %v541 = vadd.f32 %v194, %v525
    %v542 = vadd.f32 %v223, %v538
    %v543 = vmul.f32 %v541, 0.5
    %v544 = vmul.f32 %v542, 0.5
    %v545 = vtanh.pop %v543
    %v546 = vtanh.pop %v544
    %v547 = vadd.f32 %v545, 1.0
    %v548 = vadd.f32 %v546, 1.0
    %v549 = vmul.f32 %v547, 0.5
    %v550 = vmul.f32 %v548, 0.5
    %v551 = vtanh.pop %v542
    %v552 = vmul.f32 %v549, %v504
    %554 = vrot.lane.b32.xlu0 %v551, 64
    %v555 = vpop.permute.xlu0 %554
    %v557 = vmul.f32 %v549, %v555
    %559 = vrot.lane.b32.xlu0 %v557, 64
    %v560 = vpop.permute.xlu0 %559
    %v562 = vadd.f32 %v552, %v560
    %v563 = vtanh.pop %v562
    %565 = vrot.lane.b32.xlu0 %v563, 64
    %v566 = vpop.permute.xlu0 %565
    %v568 = vmul.f32 %v550, %v566
    %v569 = vpack.c.bf16 %v568, %v568
    %v571 = vsel %vm161, %v569, 0
    %573 = vmatpush.bf16.msra.mxu0 0
    %574 = vmatpush.bf16.msra.mxu0 0
    %575 = vmatpush.bf16.msra.mxu0 0
    %576 = vmatpush.bf16.msra.mxu0 0
    %577 = vmatpush.bf16.msra.mxu0 %v270
    %578 = vmatpush.bf16.msra.mxu0 %v268
    %579 = vmatpush.bf16.msra.mxu0 %v266
    %580 = vmatpush.bf16.msra.mxu0 %v264
    %581 = vmatmul.bf16.gmra.mxu0 %v571
    %v582 = vpop.f32.mrf.mxu0
    %v583 = vadd.f32 0.0, %v582
    %v584 = vpop.f32.mrf.mxu0
    %585 = vdwg.mxu0
    %586 = vmatpush.bf16.msra.mxu0 0
    %587 = vmatpush.bf16.msra.mxu0 0
    %588 = vmatpush.bf16.msra.mxu0 0
    %589 = vmatpush.bf16.msra.mxu0 0
    %590 = vmatpush.bf16.msra.mxu0 %v271
    %591 = vmatpush.bf16.msra.mxu0 %v269
    %592 = vmatpush.bf16.msra.mxu0 %v267
    %593 = vmatpush.bf16.msra.mxu0 %v265
    %594 = vmatmul.bf16.gmra.mxu0 %v571
    %v595 = vpop.f32.mrf.mxu0
    %v596 = vadd.f32 0.0, %v595
    %v597 = vpop.f32.mrf.mxu0
    %598 = vdwg.mxu0
    %v599 = vadd.f32 %v196, %v583
    %v600 = vadd.f32 %v225, %v596
    %v601 = vmul.f32 %v599, 0.5
    %v602 = vmul.f32 %v600, 0.5
    %v603 = vtanh.pop %v601
    %v604 = vtanh.pop %v602
    %v605 = vadd.f32 %v603, 1.0
    %v606 = vadd.f32 %v604, 1.0
    %v607 = vmul.f32 %v605, 0.5
    %v608 = vmul.f32 %v606, 0.5
    %v609 = vtanh.pop %v600
    %v610 = vmul.f32 %v607, %v562
    %612 = vrot.lane.b32.xlu0 %v609, 64
    %v613 = vpop.permute.xlu0 %612
    %v615 = vmul.f32 %v607, %v613
    %617 = vrot.lane.b32.xlu0 %v615, 64
    %v618 = vpop.permute.xlu0 %617
    %v620 = vadd.f32 %v610, %v618
    %v621 = vtanh.pop %v620
    %623 = vrot.lane.b32.xlu0 %v621, 64
    %v624 = vpop.permute.xlu0 %623
    %v626 = vmul.f32 %v608, %v624
    %v627 = vpack.c.bf16 %v626, %v626
    %v629 = vsel %vm161, %v627, 0
    %631 = vmatpush.bf16.msra.mxu0 0
    %632 = vmatpush.bf16.msra.mxu0 0
    %633 = vmatpush.bf16.msra.mxu0 0
    %634 = vmatpush.bf16.msra.mxu0 0
    %635 = vmatpush.bf16.msra.mxu0 %v270
    %636 = vmatpush.bf16.msra.mxu0 %v268
    %637 = vmatpush.bf16.msra.mxu0 %v266
    %638 = vmatpush.bf16.msra.mxu0 %v264
    %639 = vmatmul.bf16.gmra.mxu0 %v629
    %v640 = vpop.f32.mrf.mxu0
    %v641 = vadd.f32 0.0, %v640
    %v642 = vpop.f32.mrf.mxu0
    %643 = vdwg.mxu0
    %644 = vmatpush.bf16.msra.mxu0 0
    %645 = vmatpush.bf16.msra.mxu0 0
    %646 = vmatpush.bf16.msra.mxu0 0
    %647 = vmatpush.bf16.msra.mxu0 0
    %648 = vmatpush.bf16.msra.mxu0 %v271
    %649 = vmatpush.bf16.msra.mxu0 %v269
    %650 = vmatpush.bf16.msra.mxu0 %v267
    %651 = vmatpush.bf16.msra.mxu0 %v265
    %652 = vmatmul.bf16.gmra.mxu0 %v629
    %v653 = vpop.f32.mrf.mxu0
    %v654 = vadd.f32 0.0, %v653
    %v655 = vpop.f32.mrf.mxu0
    %656 = vdwg.mxu0
    %v657 = vadd.f32 %v199, %v641
    %v658 = vadd.f32 %v228, %v654
    %v659 = vmul.f32 %v657, 0.5
    %v660 = vmul.f32 %v658, 0.5
    %v661 = vtanh.pop %v659
    %v662 = vtanh.pop %v660
    %v663 = vadd.f32 %v661, 1.0
    %v664 = vadd.f32 %v662, 1.0
    %v665 = vmul.f32 %v663, 0.5
    %v666 = vmul.f32 %v664, 0.5
    %v667 = vtanh.pop %v658
    %v668 = vmul.f32 %v665, %v620
    %670 = vrot.lane.b32.xlu0 %v667, 64
    %v671 = vpop.permute.xlu0 %670
    %v673 = vmul.f32 %v665, %v671
    %675 = vrot.lane.b32.xlu0 %v673, 64
    %v676 = vpop.permute.xlu0 %675
    %v678 = vadd.f32 %v668, %v676
    %v679 = vtanh.pop %v678
    %681 = vrot.lane.b32.xlu0 %v679, 64
    %v682 = vpop.permute.xlu0 %681
    %v684 = vmul.f32 %v666, %v682
    %v685 = vpack.c.bf16 %v684, %v684
    %v687 = vsel %vm161, %v685, 0
    %689 = vmatpush.bf16.msra.mxu0 0
    %690 = vmatpush.bf16.msra.mxu0 0
    %691 = vmatpush.bf16.msra.mxu0 0
    %692 = vmatpush.bf16.msra.mxu0 0
    %693 = vmatpush.bf16.msra.mxu0 %v270
    %694 = vmatpush.bf16.msra.mxu0 %v268
    %695 = vmatpush.bf16.msra.mxu0 %v266
    %696 = vmatpush.bf16.msra.mxu0 %v264
    %697 = vmatmul.bf16.gmra.mxu0 %v687
    %v698 = vpop.f32.mrf.mxu0
    %v699 = vadd.f32 0.0, %v698
    %v700 = vpop.f32.mrf.mxu0
    %701 = vdwg.mxu0
    %702 = vmatpush.bf16.msra.mxu0 0
    %703 = vmatpush.bf16.msra.mxu0 0
    %704 = vmatpush.bf16.msra.mxu0 0
    %705 = vmatpush.bf16.msra.mxu0 0
    %706 = vmatpush.bf16.msra.mxu0 %v271
    %707 = vmatpush.bf16.msra.mxu0 %v269
    %708 = vmatpush.bf16.msra.mxu0 %v267
    %709 = vmatpush.bf16.msra.mxu0 %v265
    %710 = vmatmul.bf16.gmra.mxu0 %v687
    %v711 = vpop.f32.mrf.mxu0
    %v712 = vadd.f32 0.0, %v711
    %v713 = vpop.f32.mrf.mxu0
    %714 = vdwg.mxu0
    %v715 = vadd.f32 %v201, %v699
    %v716 = vadd.f32 %v230, %v712
    %v717 = vmul.f32 %v715, 0.5
    %v718 = vmul.f32 %v716, 0.5
    %v719 = vtanh.pop %v717
    %v720 = vtanh.pop %v718
    %v721 = vadd.f32 %v719, 1.0
    %v722 = vadd.f32 %v720, 1.0
    %v723 = vmul.f32 %v721, 0.5
    %v724 = vmul.f32 %v722, 0.5
    %v725 = vtanh.pop %v716
    %v726 = vmul.f32 %v723, %v678
    %728 = vrot.lane.b32.xlu0 %v725, 64
    %v729 = vpop.permute.xlu0 %728
    %v731 = vmul.f32 %v723, %v729
    %733 = vrot.lane.b32.xlu0 %v731, 64
    %v734 = vpop.permute.xlu0 %733
    %v736 = vadd.f32 %v726, %v734
    %v737 = vtanh.pop %v736
    %739 = vrot.lane.b32.xlu0 %v737, 64
    %v740 = vpop.permute.xlu0 %739
    %v742 = vmul.f32 %v724, %v740
    %v743 = vpack.c.bf16 %v394, %v336
    %v744 = vpack.c.bf16 %v510, %v452
    %v745 = vpack.c.bf16 %v626, %v568
    %v746 = vpack.c.bf16 %v742, %v684
    %v747 = vld [vmem:[%s4] sm:$0xf]
    %v748 = vld [vmem:[%s4 + $0x4] sm:$0xf]
    %v749 = vld [vmem:[%s4 + $0x8] sm:$0xf]
    %v750 = vld [vmem:[%s4 + $0xc] sm:$0xf]
    %v751 = vld [vmem:[%s4 + $0x10] sm:$0xf]
    %v752 = vld [vmem:[%s4 + $0x14] sm:$0xf]
    %v753 = vld [vmem:[%s4 + $0x18] sm:$0xf]
    %v754 = vld [vmem:[%s4 + $0x1c] sm:$0xf]
    %v755 = vpack.c.bf16 %v684, %v742
    %v756 = vpack.c.bf16 %v568, %v626
    %v757 = vpack.c.bf16 %v452, %v510
    %v758 = vpack.c.bf16 %v336, %v394
    %v759 = vld [vmem:[%s5] sm:$0xf]
    %v760 = vld [vmem:[%s5 + $0x4] sm:$0xf]
    %v761 = vld [vmem:[%s5 + $0x8] sm:$0xf]
    %v762 = vld [vmem:[%s5 + $0xc] sm:$0xf]
    %v763 = vld [vmem:[%s5 + $0x10] sm:$0xf]
    %v764 = vld [vmem:[%s5 + $0x14] sm:$0xf]
    %v765 = vld [vmem:[%s5 + $0x18] sm:$0xf]
    %v766 = vld [vmem:[%s5 + $0x1c] sm:$0xf]
    %v775 = vunpack.c.l.b16 %v759
    %v776 = vunpack.c.l.b16 %v760
    %v777 = vunpack.c.l.b16 %v761
    %v778 = vunpack.c.l.b16 %v762
    %v779 = vunpack.c.l.b16 %v763
    %v780 = vunpack.c.l.b16 %v764
    %v781 = vunpack.c.l.b16 %v765
    %v782 = vunpack.c.l.b16 %v766
    %v783 = vpack.c.b16 %v776, %v775
    %v784 = vpack.c.b16 %v778, %v777
    %v785 = vpack.c.b16 %v780, %v779
    %v786 = vpack.c.b16 %v782, %v781
    %v792 = vsel %vm161, %v755, 0
    %v795 = vsel %vm161, %v756, 0
    %v798 = vsel %vm161, %v757, 0
    %v801 = vsel %vm161, %v758, 0
    %803 = vmatpush.bf16.msra.mxu0 0
    %804 = vmatpush.bf16.msra.mxu0 0
    %805 = vmatpush.bf16.msra.mxu0 0
    %806 = vmatpush.bf16.msra.mxu0 0
    %807 = vmatpush.bf16.msra.mxu0 %v786
    %808 = vmatpush.bf16.msra.mxu0 %v785
    %809 = vmatpush.bf16.msra.mxu0 %v784
    %810 = vmatpush.bf16.msra.mxu0 %v783
    %811 = vmatmul.bf16.gmra.mxu0 %v792
    %v812 = vpop.f32.mrf.mxu0
    %v813 = vadd.f32 0.0, %v812
    %v814 = vpop.f32.mrf.mxu0
    %v815 = vadd.f32 0.0, %v814
    %816 = vmatmul.bf16.gmra.mxu0 %v795
    %v817 = vpop.f32.mrf.mxu0
    %v818 = vadd.f32 0.0, %v817
    %v819 = vpop.f32.mrf.mxu0
    %v820 = vadd.f32 0.0, %v819
    %821 = vmatmul.bf16.gmra.mxu0 %v798
    %v822 = vpop.f32.mrf.mxu0
    %v823 = vadd.f32 0.0, %v822
    %v824 = vpop.f32.mrf.mxu0
    %v825 = vadd.f32 0.0, %v824
    %826 = vmatmul.bf16.gmra.mxu0 %v801
    %v827 = vpop.f32.mrf.mxu0
    %v828 = vadd.f32 0.0, %v827
    %v829 = vpop.f32.mrf.mxu0
    %v830 = vadd.f32 0.0, %v829
    %831 = vdwg.mxu0
    %v840 = vunpack.c.l.b16 %v747
    %v841 = vunpack.c.l.b16 %v748
    %v842 = vunpack.c.l.b16 %v749
    %v843 = vunpack.c.l.b16 %v750
    %v844 = vunpack.c.l.b16 %v751
    %v845 = vunpack.c.l.b16 %v752
    %v846 = vunpack.c.l.b16 %v753
    %v847 = vunpack.c.l.b16 %v754
    %v848 = vpack.c.b16 %v841, %v840
    %v849 = vpack.c.b16 %v843, %v842
    %v850 = vpack.c.b16 %v845, %v844
    %v851 = vpack.c.b16 %v847, %v846
    %v857 = vsel %vm161, %v743, 0
    %v860 = vsel %vm161, %v744, 0
    %v863 = vsel %vm161, %v745, 0
    %v866 = vsel %vm161, %v746, 0
    %868 = vmatpush.bf16.msra.mxu0 0
    %869 = vmatpush.bf16.msra.mxu0 0
    %870 = vmatpush.bf16.msra.mxu0 0
    %871 = vmatpush.bf16.msra.mxu0 0
    %872 = vmatpush.bf16.msra.mxu0 %v851
    %873 = vmatpush.bf16.msra.mxu0 %v850
    %874 = vmatpush.bf16.msra.mxu0 %v849
    %875 = vmatpush.bf16.msra.mxu0 %v848
    %876 = vmatmul.bf16.gmra.mxu0 %v857
    %v877 = vpop.f32.mrf.mxu0
    %v878 = vadd.f32 %v813, %v877
    %v879 = vpop.f32.mrf.mxu0
    %v880 = vadd.f32 %v815, %v879
    %881 = vmatmul.bf16.gmra.mxu0 %v860
    %v882 = vpop.f32.mrf.mxu0
    %v883 = vadd.f32 %v818, %v882
    %v884 = vpop.f32.mrf.mxu0
    %v885 = vadd.f32 %v820, %v884
    %886 = vmatmul.bf16.gmra.mxu0 %v863
    %v887 = vpop.f32.mrf.mxu0
    %v888 = vadd.f32 %v823, %v887
    %v889 = vpop.f32.mrf.mxu0
    %v890 = vadd.f32 %v825, %v889
    %891 = vmatmul.bf16.gmra.mxu0 %v866
    %v892 = vpop.f32.mrf.mxu0
    %v893 = vadd.f32 %v828, %v892
    %v894 = vpop.f32.mrf.mxu0
    %v895 = vadd.f32 %v830, %v894
    %896 = vdwg.mxu0
    %v897 = vld [vmem:[%s6] sm:$0x1]
    %v899 = vperm.slane %v897, 0
    %v901 = vadd.f32 %v878, %v899
    %v902 = vadd.f32 %v880, %v899
    %v903 = vadd.f32 %v883, %v899
    %v904 = vadd.f32 %v885, %v899
    %v905 = vadd.f32 %v888, %v899
    %v906 = vadd.f32 %v890, %v899
    %v907 = vadd.f32 %v893, %v899
    %v908 = vadd.f32 %v895, %v899
    %vm909 = vcmp.gt.f32.partialorder %v901, 0.0
    %vm910 = vcmp.gt.f32.partialorder %v902, 0.0
    %vm911 = vcmp.gt.f32.partialorder %v903, 0.0
    %vm912 = vcmp.gt.f32.partialorder %v904, 0.0
    %vm913 = vcmp.gt.f32.partialorder %v905, 0.0
    %vm914 = vcmp.gt.f32.partialorder %v906, 0.0
    %vm915 = vcmp.gt.f32.partialorder %v907, 0.0
    %vm916 = vcmp.gt.f32.partialorder %v908, 0.0
    %v917 = vmul.f32 %v901, 0.01
    %v918 = vmul.f32 %v902, 0.01
    %v919 = vmul.f32 %v903, 0.01
    %v920 = vmul.f32 %v904, 0.01
    %v921 = vmul.f32 %v905, 0.01
    %v922 = vmul.f32 %v906, 0.01
    %v923 = vmul.f32 %v907, 0.01
    %v924 = vmul.f32 %v908, 0.01
    %v925 = vsel %vm909, %v901, %v917
    %v926 = vsel %vm910, %v902, %v918
    %v927 = vsel %vm911, %v903, %v919
    %v928 = vsel %vm912, %v904, %v920
    %v929 = vsel %vm913, %v905, %v921
    %v930 = vsel %vm914, %v906, %v922
    %v931 = vsel %vm915, %v907, %v923
    %v932 = vsel %vm916, %v908, %v924
    %v933 = vpack.c.bf16 %v926, %v925
    %v934 = vpack.c.bf16 %v928, %v927
    %v935 = vpack.c.bf16 %v930, %v929
    %v936 = vpack.c.bf16 %v932, %v931
    %v937 = vld [vmem:[%s7] sm:$0xf]
    %v938 = vld [vmem:[%s7 + $0x4] sm:$0xf]
    %v939 = vld [vmem:[%s7 + $0x8] sm:$0xf]
    %v940 = vld [vmem:[%s7 + $0xc] sm:$0xf]
    %v941 = vld [vmem:[%s8] sm:$0x1]
    %v943 = vperm.slane %v941, 0
    %v949 = vunpack.c.l.b16 %v937
    %v950 = vunpack.c.l.b16 %v938
    %v951 = vunpack.c.l.b16 %v939
    %v952 = vunpack.c.l.b16 %v940
    %v953 = vpack.c.b16 %v950, %v949
    %v954 = vpack.c.b16 %v952, %v951
    %vm957 = vcmask 261120
    %v959 = vsel %vm957, %v933, 0
    %v962 = vsel %vm957, %v934, 0
    %v965 = vsel %vm957, %v935, 0
    %v968 = vsel %vm957, %v936, 0
    %970 = vmatpush.bf16.msra.mxu0 0
    %971 = vmatpush.bf16.msra.mxu0 0
    %972 = vmatpush.bf16.msra.mxu0 0
    %973 = vmatpush.bf16.msra.mxu0 0
    %974 = vmatpush.bf16.msra.mxu0 0
    %975 = vmatpush.bf16.msra.mxu0 0
    %976 = vmatpush.bf16.msra.mxu0 %v954
    %977 = vmatpush.bf16.msra.mxu0 %v953
    %978 = vmatmul.bf16.gmra.mxu0 %v959
    %v979 = vpop.f32.mrf.mxu0
    %v980 = vadd.f32 %v943, %v979
    %v981 = vpop.f32.mrf.mxu0
    %v982 = vadd.f32 %v943, %v981
    %983 = vmatmul.bf16.gmra.mxu0 %v962
    %v984 = vpop.f32.mrf.mxu0
    %v985 = vadd.f32 %v943, %v984
    %v986 = vpop.f32.mrf.mxu0
    %v987 = vadd.f32 %v943, %v986
    %988 = vmatmul.bf16.gmra.mxu0 %v965
    %v989 = vpop.f32.mrf.mxu0
    %v990 = vadd.f32 %v943, %v989
    %v991 = vpop.f32.mrf.mxu0
    %v992 = vadd.f32 %v943, %v991
    %993 = vmatmul.bf16.gmra.mxu0 %v968
    %v994 = vpop.f32.mrf.mxu0
    %v995 = vadd.f32 %v943, %v994
    %v996 = vpop.f32.mrf.mxu0
    %v997 = vadd.f32 %v943, %v996
    %998 = vdwg.mxu0
    %999 = vst [vmem:[#allocation8] sm:$0xff] %v980
    %1000 = vst [vmem:[#allocation8 + $0x8] sm:$0xff] %v982
    %1001 = vst [vmem:[#allocation8 + $0x10] sm:$0xff] %v985
    %1002 = vst [vmem:[#allocation8 + $0x18] sm:$0xff] %v987
    %1003 = vst [vmem:[#allocation8 + $0x20] sm:$0xff] %v990
    %1004 = vst [vmem:[#allocation8 + $0x28] sm:$0xff] %v992
    %1005 = vst [vmem:[#allocation8 + $0x30] sm:$0xff] %v995
    %1006 = vst [vmem:[#allocation8 + $0x38] sm:$0xff] %v997
    // Predicated region
    $region50: #{tpu_custom_call.1} parent=1 // pred_check
      _
    $region51: #{tpu_custom_call.1} parent=1 // pred_check_branch
      %1008 = sbr.rel (0) target = $region53
    $region52: #{tpu_custom_call.1} parent=1 // pred_region
      %1010 = vsyncadd [#allocation4], 0
      %s1011 = sshll.u32 [#allocation8], 4
      %s1012 = int_to_ptr.vmem [resolvable:$true] %s1011
      %s1013 = sshll.u32 %s9, 4
      %s1014 = int_to_ptr.hbm [resolvable:$true] %s1013
      %1019 = dma.vmem_to_hbm [thread:$0]  %s1012, 1024, %s1014, [#allocation4], 128, 128, 8
    $region53: #{tpu_custom_call.1} parent=1 // pred_fallthru
      _
    // Predicated region
    $region54: #{tpu_custom_call.1} parent=1 // pred_check
      _
    $region55: #{tpu_custom_call.1} parent=1 // pred_check_branch
      %1021 = sbr.rel (0) target = $region57
    $region56: #{tpu_custom_call.1} parent=1 // pred_region
      %1023 = dma.done [#allocation4], 1024
    $region57: #{tpu_custom_call.1} parent=1 // pred_fallthru
      _
    %1024 = vsyncpa [#allocation3], 1
    %1025 = vsyncpa [#allocation6], 1
    %1026 = vsyncpa [#allocation4], 1

</llo_original>
